<compile_context>
chip_gen: v5e
topology: v5e:2x2
jax: 0.10.0
libtpu: 0.0.40
codegen_flags: <defaults>
</compile_context>

<pallas_src>
import functools
import math

import jax
import jax.numpy as jnp
from jax.experimental import pallas as pl
from jax.experimental.pallas import tpu as pltpu


_TILE_BYTES = 4 << 20    # target bytes per x/out tile (large end of 2-4 MiB)
_VMEM_LIMIT = 48 << 20   # explicit scoped-VMEM limit; safe on v5e/v6e/v7x


def _rope_kernel(x_ref, cos_ref, sin_ref, o_ref):
    """out = x * cos_full + swap(x) * sin_signed on a (rows, lanes) tile."""
    x = x_ref[...]          # (rows, L), x.dtype
    cos = cos_ref[...]      # (rows, L): cos[k] at lanes 2k and 2k+1
    sin = sin_ref[...]      # (rows, L): -sin[k] at lane 2k, +sin[k] at lane 2k+1

    lanes = x.shape[-1]
    # swap adjacent lanes via two XLU rolls + even/odd lane select:
    #   swap[2k] = x[2k+1], swap[2k+1] = x[2k]
    roll_left = pltpu.roll(x, shift=lanes - 1, axis=1)   # result[i] = x[(i+1) % L]
    roll_right = pltpu.roll(x, shift=1, axis=1)          # result[i] = x[(i-1) % L]
    lane = jax.lax.broadcasted_iota(jnp.int32, x.shape, 1)
    swap = jnp.where((lane & 1) == 0, roll_left, roll_right)

    # out[2k]   = x[2k]*cos[k]   - x[2k+1]*sin[k]
    # out[2k+1] = x[2k+1]*cos[k] + x[2k]*sin[k]
    o_ref[...] = (x * cos + swap * sin).astype(o_ref.dtype)


@functools.lru_cache(maxsize=64)
def _rope_tables(s_rows: int, d: int, start_pos: int, base: float,
                 fold: int, dtype_str: str):
    """Lane-folded cos / signed-sin tables, cached across calls."""
    dtype = jnp.dtype(dtype_str)
    inv_freq = 1.0 / (base ** (jnp.arange(0, d, 2, dtype=jnp.float32) / d))
    t = jnp.arange(start_pos, start_pos + s_rows, dtype=jnp.float32)  # f32 angles
    freqs = t[:, None] * inv_freq[None, :]                            # (s_rows, d//2)
    cos = jnp.cos(freqs)
    sin = jnp.sin(freqs)
    cos_full = jnp.repeat(cos, 2, axis=-1)                            # (s_rows, d)
    sin_signed = jnp.stack([-sin, sin], axis=-1).reshape(s_rows, d)   # (s_rows, d)
    s2, lanes = s_rows // fold, d * fold
    return (cos_full.reshape(s2, lanes).astype(dtype),
            sin_signed.reshape(s2, lanes).astype(dtype))


def rotary_positional_encoding(x, start_pos: int = 0,
                               max_seq_len: int = 256, base: float = 10000.0):
    """Pallas-backed equivalent of RotaryPositionalEncoding.forward."""
    orig_shape = x.shape
    s, d = orig_shape[-2], orig_shape[-1]
    assert d % 2 == 0, "Embedding dimension must be even"
    b = math.prod(orig_shape[:-2]) if len(orig_shape) > 2 else 1
    x3 = x.reshape(b, s, d)

    # --- lane fold: make the kernel's last dim a multiple of 128 lanes
    r = 1 if d % 128 == 0 else 128 // math.gcd(d, 128)
    s_pad = pl.cdiv(s, r) * r
    if s_pad != s:
        # pad a few seq rows (cheap) rather than accept masked partial stores
        x3 = jnp.pad(x3, ((0, 0), (0, s_pad - s), (0, 0)))
    s2, lanes = s_pad // r, d * r

    dtype = jnp.dtype(x.dtype)
    itemsize = dtype.itemsize
    sub = max(8, 32 // itemsize)         # native sublane multiple: f32 8 / bf16 16 / i8 32
    bpr = lanes * itemsize               # bytes per folded row

    # --- cos / signed-sin tables (host-cached across calls; f32 angles)
    cos2, sin2 = _rope_tables(s_pad, d, int(start_pos), float(base), r, dtype.name)

    total_elems = b * s2 * lanes
    cost = pl.CostEstimate(flops=3 * total_elems, transcendentals=0,
                           bytes_accessed=(2 * b + 2) * s2 * lanes * itemsize)

    # --- decide tiling: batch-fold (short seq / decode) vs seq-tiled (long seq)
    seq_bytes = s2 * bpr
    k = 0
    if b > 1 and 2 * seq_bytes <= _TILE_BYTES:
        m = sub // math.gcd(s2, sub)                 # k*s2 % sub == 0  iff  k % m == 0
        k = (min(b, _TILE_BYTES // seq_bytes) // m) * m
        if k >= m and k >= b and b >= 2 * m:
            # keep >= 2 grid steps so v7x's second TensorCore is not idle
            k = pl.cdiv(b // 2, m) * m
        if k < m:
            k = 0                                    # cannot align; fall back

    if k > 0:
        # ---- batch-fold path: flat rows, tile = k whole (folded) sequences ----
        rows = b * s2
        tile_rows = k * s2
        x2 = x3.reshape(rows, lanes)
        cos_t = jnp.tile(cos2, (k, 1))               # <= one tile; constant block
        sin_t = jnp.tile(sin2, (k, 1))               # index -> stays VMEM-resident
        out = pl.pallas_call(
            _rope_kernel,
            out_shape=jax.ShapeDtypeStruct((rows, lanes), x.dtype),
            grid=(pl.cdiv(b, k),),
            in_specs=[
                pl.BlockSpec((tile_rows, lanes), lambda t: (t, 0)),
                pl.BlockSpec((tile_rows, lanes), lambda t: (0, 0)),
                pl.BlockSpec((tile_rows, lanes), lambda t: (0, 0)),
            ],
            out_specs=pl.BlockSpec((tile_rows, lanes), lambda t: (t, 0)),
            compiler_params=pltpu.CompilerParams(
                dimension_semantics=("parallel",),
                vmem_limit_bytes=_VMEM_LIMIT),
            cost_estimate=cost,
        )(x2, cos_t, sin_t)
        out = out.reshape(b, s_pad, d)
    else:
        # ---- seq-tiled path: grid = (seq tiles, batch), batch innermost ----
        x2 = x3.reshape(b, s2, lanes)
        rows_target = max(sub, (_TILE_BYTES // bpr) // sub * sub)
        if s2 <= rows_target:
            ts = s2
        else:
            ts = rows_target
            for cand in range(ts, ts // 2, -sub):    # prefer no partial edge tile
                if s2 % cand == 0:
                    ts = cand
                    break
        n_seq = pl.cdiv(s2, ts)
        if n_seq * b < 2 and s2 >= 2 * sub:          # b == 1: keep >= 2 grid steps
            ts = pl.cdiv(pl.cdiv(s2, 2), sub) * sub
            n_seq = pl.cdiv(s2, ts)

        out = pl.pallas_call(
            _rope_kernel,
            out_shape=jax.ShapeDtypeStruct((b, s2, lanes), x.dtype),
            grid=(n_seq, b),   # batch innermost -> cos/sin tiles stay VMEM-resident
            in_specs=[
                pl.BlockSpec((None, ts, lanes), lambda j, bb: (bb, j, 0)),
                pl.BlockSpec((ts, lanes), lambda j, bb: (j, 0)),
                pl.BlockSpec((ts, lanes), lambda j, bb: (j, 0)),
            ],
            out_specs=pl.BlockSpec((None, ts, lanes), lambda j, bb: (bb, j, 0)),
            compiler_params=pltpu.CompilerParams(
                dimension_semantics=("parallel", "parallel"),
                vmem_limit_bytes=_VMEM_LIMIT),
            cost_estimate=cost,
        )(x2, cos2, sin2)
        out = out.reshape(b, s_pad, d)

    if s_pad != s:
        out = out[:, :s, :]
    return out.reshape(orig_shape)


def _rope_reference(x, start_pos: int = 0,
                    max_seq_len: int = 256, base: float = 10000.0):
    """Plain-JAX transcription of the PyTorch forward, for verification."""
    orig_shape = x.shape
    s, d = orig_shape[-2], orig_shape[-1]
    inv_freq = 1.0 / (base ** (jnp.arange(0, d, 2, dtype=jnp.float32) / d))
    cache_len = max(max_seq_len, start_pos + s)
    t = jnp.arange(cache_len, dtype=jnp.float32)
    freqs = jnp.outer(t, inv_freq)
    cos = jnp.cos(freqs)[start_pos:start_pos + s].astype(x.dtype)
    sin = jnp.sin(freqs)[start_pos:start_pos + s].astype(x.dtype)
    x1, x2 = x[..., ::2], x[..., 1::2]
    rotated = jnp.stack([x1 * cos - x2 * sin, x1 * sin + x2 * cos], axis=-1)
    return rotated.reshape(orig_shape)


if __name__ == "__main__":
    key = jax.random.PRNGKey(0)
    k1, k2, k3, k4, k5 = jax.random.split(key, 5)

    # Case 1: B=2, S=8, D=32 -> lane fold r=4 (128 lanes), seq-tiled path
    x_a = jax.random.normal(k1, (2, 8, 32), dtype=jnp.float32)
    out_a = jax.block_until_ready(rotary_positional_encoding(x_a, start_pos=0))
    ref_a = _rope_reference(x_a, start_pos=0)
    assert out_a.shape == ref_a.shape and out_a.dtype == ref_a.dtype
    assert jnp.allclose(out_a, ref_a, atol=1e-5, rtol=1e-5), "mismatch (case 1)"

    # Case 2: B=2, S=16, D=64, nonzero start_pos (generation-style offset)
    x_b = jax.random.normal(k2, (2, 16, 64), dtype=jnp.float32)
    out_b = jax.block_until_ready(rotary_positional_encoding(x_b, start_pos=5))
    ref_b = _rope_reference(x_b, start_pos=5)
    assert jnp.allclose(out_b, ref_b, atol=1e-5, rtol=1e-5), "mismatch (case 2)"

    # Case 3: bf16 decode shape (batch, heads, seq=1, d=64) -> seq padding, bf16 math
    x_c = jax.random.normal(k3, (3, 4, 1, 64), dtype=jnp.bfloat16)
    out_c = jax.block_until_ready(rotary_positional_encoding(x_c, start_pos=7))
    ref_c = _rope_reference(x_c, start_pos=7)
    assert out_c.shape == ref_c.shape and out_c.dtype == ref_c.dtype
    assert jnp.allclose(out_c.astype(jnp.float32), ref_c.astype(jnp.float32),
                        atol=3e-2, rtol=3e-2), "mismatch (case 3)"

    # Case 4: (batch, heads, seq=3, d=64) f32 -> batch-fold path + seq padding
    x_d = jax.random.normal(k4, (4, 8, 3, 64), dtype=jnp.float32)
    out_d = jax.block_until_ready(rotary_positional_encoding(x_d, start_pos=2))
    ref_d = _rope_reference(x_d, start_pos=2)
    assert jnp.allclose(out_d, ref_d, atol=1e-5, rtol=1e-5), "mismatch (case 4)"

    # Case 5: B=1, S=32, D=128 -> b==1 split into >=2 seq tiles (dual-TC rule)
    x_e = jax.random.normal(k5, (1, 32, 128), dtype=jnp.float32)
    out_e = jax.block_until_ready(rotary_positional_encoding(x_e, start_pos=0))
    ref_e = _rope_reference(x_e, start_pos=0)
    assert jnp.allclose(out_e, ref_e, atol=1e-5, rtol=1e-5), "mismatch (case 5)"

    print("KERNEL_OK")
</pallas_src>

<mosaic_0001>
module attributes {stable_mosaic.version = 11 : i64} {
  func.func @_rope_kernel(%arg0: i32, %arg1: i32, %arg2: memref<1x2x128xf32, #tpu.memory_space<vmem>>, %arg3: memref<2x128xf32, #tpu.memory_space<vmem>>, %arg4: memref<2x128xf32, #tpu.memory_space<vmem>>, %arg5: memref<1x2x128xf32, #tpu.memory_space<vmem>>) attributes {dimension_semantics = [#tpu.dimension_semantics<parallel>, #tpu.dimension_semantics<parallel>], iteration_bounds = array<i64: 1, 2>, scalar_prefetch = 0 : i64, scratch_operands = 0 : i64, tpu.core_type = #tpu.core_type<tc>, window_params = [{transform_indices = @transform_0, window_bounds = array<i64: 1, 2, 128>}, {transform_indices = @transform_1, window_bounds = array<i64: 2, 128>}, {transform_indices = @transform_2, window_bounds = array<i64: 2, 128>}, {transform_indices = @transform_3, window_bounds = array<i64: 1, 2, 128>}]} {
    %c0 = arith.constant 0 : index
    %c0_0 = arith.constant 0 : index
    %c0_1 = arith.constant 0 : index
    %0 = vector.load %arg2[%c0, %c0_0, %c0_1] : memref<1x2x128xf32, #tpu.memory_space<vmem>>, vector<1x2x128xf32>
    %1 = vector.shape_cast %0 : vector<1x2x128xf32> to vector<2x128xf32>
    %c0_2 = arith.constant 0 : index
    %c0_3 = arith.constant 0 : index
    %2 = vector.load %arg3[%c0_2, %c0_3] : memref<2x128xf32, #tpu.memory_space<vmem>>, vector<2x128xf32>
    %c0_4 = arith.constant 0 : index
    %c0_5 = arith.constant 0 : index
    %3 = vector.load %arg4[%c0_4, %c0_5] : memref<2x128xf32, #tpu.memory_space<vmem>>, vector<2x128xf32>
    %c127_i32 = arith.constant 127 : i32
    %4 = tpu.dynamic_rotate %1 by %c127_i32 dim 1 : vector<2x128xf32>, i32 -> vector<2x128xf32>
    %c1_i32 = arith.constant 1 : i32
    %5 = tpu.dynamic_rotate %1 by %c1_i32 dim 1 : vector<2x128xf32>, i32 -> vector<2x128xf32>
    %6 = tpu.iota {dimensions = array<i32: 1>} : vector<2x128xi32>
    %c1_i32_6 = arith.constant 1 : i32
    %7 = vector.broadcast %c1_i32_6 : i32 to vector<2x128xi32>
    %8 = arith.andi %6, %7 : vector<2x128xi32>
    %c0_i32 = arith.constant 0 : i32
    %9 = vector.broadcast %c0_i32 : i32 to vector<2x128xi32>
    %10 = arith.cmpi eq, %8, %9 : vector<2x128xi32>
    %11 = arith.select %10, %4, %5 : vector<2x128xi1>, vector<2x128xf32>
    %12 = arith.mulf %1, %2 : vector<2x128xf32>
    %13 = arith.mulf %11, %3 : vector<2x128xf32>
    %14 = arith.addf %12, %13 : vector<2x128xf32>
    %c0_7 = arith.constant 0 : index
    %c0_8 = arith.constant 0 : index
    %c0_9 = arith.constant 0 : index
    %15 = vector.load %arg5[%c0_7, %c0_8, %c0_9] : memref<1x2x128xf32, #tpu.memory_space<vmem>>, vector<1x2x128xf32>
    %16 = vector.shape_cast %15 : vector<1x2x128xf32> to vector<2x128xf32>
    %17 = vector.shape_cast %14 : vector<2x128xf32> to vector<1x2x128xf32>
    tpu.vector_store %arg5[%c0_7, %c0_8, %c0_9], %17 {strides = array<i32>} : memref<1x2x128xf32, #tpu.memory_space<vmem>>, vector<1x2x128xf32>,
    return
  }
  func.func @transform_0(%arg0: i32, %arg1: i32) -> (i32, i32, i32) {
    %c0_i32 = arith.constant 0 : i32
    %c0_i32_0 = arith.constant 0 : i32
    return %arg1, %arg0, %c0_i32 : i32, i32, i32
  }
  func.func @transform_1(%arg0: i32, %arg1: i32) -> (i32, i32) {
    %c0_i32 = arith.constant 0 : i32
    %c0_i32_0 = arith.constant 0 : i32
    return %arg0, %c0_i32 : i32, i32
  }
  func.func @transform_2(%arg0: i32, %arg1: i32) -> (i32, i32) {
    %c0_i32 = arith.constant 0 : i32
    %c0_i32_0 = arith.constant 0 : i32
    return %arg0, %c0_i32 : i32, i32
  }
  func.func @transform_3(%arg0: i32, %arg1: i32) -> (i32, i32, i32) {
    %c0_i32 = arith.constant 0 : i32
    %c0_i32_0 = arith.constant 0 : i32
    return %arg1, %arg0, %c0_i32 : i32, i32, i32
  }
}

</mosaic_0001>

<llo_original>
// kernel: tpu_custom_call.1
$region0: #{tpu_custom_call.1}
  #allocation0 [shape = 'u32[]', space=smem, size = 0x4, offset = 0x4, fixed_abs, tag = 'smem constant byte address 0x4 - core index']
  #allocation1 [shape = 'u32[72,128]{1,0:T(1,128)}', space=vmem, size = 0x9000, scoped, tag = 'internal scratch']
  %s0 = inlined_call_operand.hbm [shape: f32[2,2,128], index: 0, kind: input, shape index: {}]
  %s1 = inlined_call_operand.hbm [shape: f32[2,128], index: 1, kind: input, shape index: {}]
  %s2 = inlined_call_operand.hbm [shape: f32[2,128], index: 2, kind: input, shape index: {}]
  %s3 = inlined_call_operand.hbm [shape: f32[2,2,128], index: 3, kind: output, shape index: {}]
  %s4 = sld [smem:[#allocation0]]
  $region57: #{tpu_custom_call.1} parent=0
    _
  %s6 = ssub.s32 1, %s4
  %s7 = scalar_select 0, %s6, %s4
  $region1: #{tpu_custom_call.1} parent=0
    #allocation2 [shape = 'u8[2048]{0}', space=vmem, size = 0x800, scoped, tag = 'input window, operand 0']
    #allocation3 [shape = 's32[2]{0}', space=sflag, size = 0x8, scoped, tag = 'scoped memory for tpu_custom_call.1']
    #allocation4 [shape = 's32[2]{0}', space=sflag, size = 0x8, scoped, tag = 'scoped memory for tpu_custom_call.1']
    #allocation5 [shape = 'u8[1024]{0}', space=vmem, size = 0x400, scoped, tag = 'input window, operand 1, single buffered']
    #allocation6 [shape = 's32[1]{0}', space=sflag, size = 0x4, scoped, tag = 'scoped memory for tpu_custom_call.1']
    #allocation7 [shape = 'u8[1024]{0}', space=vmem, size = 0x400, scoped, tag = 'input window, operand 2, single buffered']
    #allocation8 [shape = 'u8[2048]{0}', space=vmem, size = 0x800, scoped, tag = 'output window, operand 0']
    %8 = vsyncpa [#allocation3], 0
    %s9 = scalar_lea.sflag [#allocation3], 1
    %10 = vsyncpa %s9, 0
    %11 = vsyncpa [#allocation6], 0
    %12 = vsyncpa [#allocation4], 0
    %s13 = scalar_lea.sflag [#allocation4], 1
    %14 = vsyncpa %s13, 0
    loop: start=0, step=1, limit=4
    $region2: #{tpu_custom_call.1} parent=1 // loop_pre_header
      _
    $region3: #{tpu_custom_call.1} parent=1 // loop_header
      %s16 = sphi 0, %s20
      %p17 = scmp.ge.s32.totalorder %s16, 4
      %s23 = sphi 0, %s35
      %s24 = sphi 0, %s31
      %s25 = sphi 0, %s23
      %s26 = sphi 0, %s24
      %s27 = sphi 0, %s25
      %s28 = sphi 0, %s26
      %s40 = sphi 0, %s42
      %s43 = sphi 0, %s40
      %s44 = sphi 0, %s43
      %s60 = sphi 0, %s44
      %s66 = sphi 0, %s68
      %s69 = sphi 0, %s66
      %s70 = sphi 0, %s69
      %s86 = sphi 0, %s70
      %s92 = sphi 0, %s94
      %s95 = sphi 0, %s92
      %s96 = sphi 0, %s95
      %s112 = sphi 0, %s96
      %s120 = sphi 0, %s122
      %s123 = sphi 0, %s120
      %s124 = sphi 0, %s123
      %s140 = sphi 0, %s124
    $region4: #{tpu_custom_call.1} parent=1 // loop_header_branch
      %19 = sbr.rel (%p17) target = $region8
    $region5: #{tpu_custom_call.1} parent=1 // loop_body
      %s21 = ssub.s32 %s16, 1
      %s22 = ssub.s32 %s16, 2
      %s29 = sadd.s32 1, %s24
      %p30 = scmp.ge.s32.totalorder %s29, 2
      %s31 = scalar_select %p30, 0, %s29
      %s32 = sadd.s32 1, %s23
      %s33 = scalar_select %p30, %s32, %s23
      %p34 = scmp.ge.s32.totalorder %s33, 1
      %s35 = scalar_select %p34, 0, %s33
      %s36 = ssub.s32 %s24, %s31
      %s37 = ssub.s32 %s23, %s35
      %s38 = sor.u32 %s36, %s37
      %p39 = scmp.eq.s32.totalorder %s38, 0
      %s41 = sadd.s32 %s40, 1
      %s42 = scalar_select %p39, %s40, %s41
      %p45 = pneg %p39
      %p46 = scmp.eq.s32.totalorder %s16, 1
      %p47 = por %p45, %p46
      %p48 = scmp.ne.s32.totalorder %s40, %s43
      %p49 = scmp.eq.s32.totalorder %s16, 0
      %p50 = por %p48, %p49
      %p51 = scmp.ne.s32.totalorder %s40, %s43
      %p52 = scmp.eq.s32.totalorder %s21, 1
      %p53 = por %p51, %p52
      %p54 = scmp.ne.s32.totalorder %s43, %s44
      %p55 = scmp.eq.s32.totalorder %s21, 0
      %p56 = por %p54, %p55
      %p57 = scmp.ne.s32.totalorder %s43, %s44
      %p58 = scmp.eq.s32.totalorder %s22, 1
      %p59 = por %p57, %p58
      %p61 = scmp.ne.s32.totalorder %s44, %s60
      %p62 = scmp.eq.s32.totalorder %s22, 0
      %p63 = por %p61, %p62
      %s64 = ssub.s32 %s23, %s35
      %p65 = scmp.eq.s32.totalorder %s64, 0
      %s67 = sadd.s32 %s66, 1
      %s68 = scalar_select %p65, %s66, %s67
      %p71 = pneg %p65
      %p72 = scmp.eq.s32.totalorder %s16, 1
      %p73 = por %p71, %p72
      %p74 = scmp.ne.s32.totalorder %s66, %s69
      %p75 = scmp.eq.s32.totalorder %s16, 0
      %p76 = por %p74, %p75
      %p77 = scmp.ne.s32.totalorder %s66, %s69
      %p78 = scmp.eq.s32.totalorder %s21, 1
      %p79 = por %p77, %p78
      %p80 = scmp.ne.s32.totalorder %s69, %s70
      %p81 = scmp.eq.s32.totalorder %s21, 0
      %p82 = por %p80, %p81
      %p83 = scmp.ne.s32.totalorder %s69, %s70
      %p84 = scmp.eq.s32.totalorder %s22, 1
      %p85 = por %p83, %p84
      %p87 = scmp.ne.s32.totalorder %s70, %s86
      %p88 = scmp.eq.s32.totalorder %s22, 0
      %p89 = por %p87, %p88
      %s90 = ssub.s32 %s23, %s35
      %p91 = scmp.eq.s32.totalorder %s90, 0
      %s93 = sadd.s32 %s92, 1
      %s94 = scalar_select %p91, %s92, %s93
      %p97 = pneg %p91
      %p98 = scmp.eq.s32.totalorder %s16, 1
      %p99 = por %p97, %p98
      %p100 = scmp.ne.s32.totalorder %s92, %s95
      %p101 = scmp.eq.s32.totalorder %s16, 0
      %p102 = por %p100, %p101
      %p103 = scmp.ne.s32.totalorder %s92, %s95
      %p104 = scmp.eq.s32.totalorder %s21, 1
      %p105 = por %p103, %p104
      %p106 = scmp.ne.s32.totalorder %s95, %s96
      %p107 = scmp.eq.s32.totalorder %s21, 0
      %p108 = por %p106, %p107
      %p109 = scmp.ne.s32.totalorder %s95, %s96
      %p110 = scmp.eq.s32.totalorder %s22, 1
      %p111 = por %p109, %p110
      %p113 = scmp.ne.s32.totalorder %s96, %s112
      %p114 = scmp.eq.s32.totalorder %s22, 0
      %p115 = por %p113, %p114
      %s116 = ssub.s32 %s24, %s31
      %s117 = ssub.s32 %s23, %s35
      %s118 = sor.u32 %s116, %s117
      %p119 = scmp.eq.s32.totalorder %s118, 0
      %s121 = sadd.s32 %s120, 1
      %s122 = scalar_select %p119, %s120, %s121
      %p125 = pneg %p119
      %p126 = scmp.eq.s32.totalorder %s16, 1
      %p127 = por %p125, %p126
      %p128 = scmp.ne.s32.totalorder %s120, %s123
      %p129 = scmp.eq.s32.totalorder %s16, 0
      %p130 = por %p128, %p129
      %p131 = scmp.ne.s32.totalorder %s120, %s123
      %p132 = scmp.eq.s32.totalorder %s21, 1
      %p133 = por %p131, %p132
      %p134 = scmp.ne.s32.totalorder %s123, %s124
      %p135 = scmp.eq.s32.totalorder %s21, 0
      %p136 = por %p134, %p135
      %p137 = scmp.ne.s32.totalorder %s123, %s124
      %p138 = scmp.eq.s32.totalorder %s22, 1
      %p139 = por %p137, %p138
      %p141 = scmp.ne.s32.totalorder %s124, %s140
      %p142 = scmp.eq.s32.totalorder %s22, 0
      %p143 = por %p141, %p142
      %p144 = scmp.le.s32.totalorder 1, %s16
      %p145 = scmp.lt.s32.totalorder %s16, 3
      %p146 = pnand %p144, %p145
      %p147 = pneg %p146
      // Predicated region
      $region9: #{tpu_custom_call.1} parent=5 // pred_check
        _
      $region10: #{tpu_custom_call.1} parent=5 // pred_check_branch
        %149 = sbr.rel (%p146) target = $region12
      $region11: #{tpu_custom_call.1} parent=5 // pred_region
        %s150 = ssub.s32 %s16, 1
        // Predicated region
        $region13: #{tpu_custom_call.1} parent=11 // pred_check
          %p151 = pneg %p82
        $region14: #{tpu_custom_call.1} parent=11 // pred_check_branch
          %153 = sbr.rel (%p151) target = $region16
        $region15: #{tpu_custom_call.1} parent=11 // pred_region
          %155 = vsyncadd [#allocation6], 0
          %s156 = smul.addr %s25, 2
          %s157 = scalar_lea.hbm %s1, %s156
          %s159 = sshll.u32 %s157, 4
          %s160 = int_to_ptr.hbm [resolvable:$true] %s159
          %s161 = sshll.u32 [#allocation5], 4
          %s162 = int_to_ptr.vmem [resolvable:$true] %s161
          %164 = dma.hbm_to_vmem [thread:$0]  %s160, 32, %s162, [#allocation6]
        $region16: #{tpu_custom_call.1} parent=11 // pred_fallthru
          _
        // Predicated region
        $region17: #{tpu_custom_call.1} parent=11 // pred_check
          %p165 = pneg %p108
        $region18: #{tpu_custom_call.1} parent=11 // pred_check_branch
          %167 = sbr.rel (%p165) target = $region20
        $region19: #{tpu_custom_call.1} parent=11 // pred_region
          %169 = vsyncadd [#allocation6], 0
          %s170 = smul.addr %s25, 2
          %s171 = scalar_lea.hbm %s2, %s170
          %s173 = sshll.u32 %s171, 4
          %s174 = int_to_ptr.hbm [resolvable:$true] %s173
          %s175 = sshll.u32 [#allocation7], 4
          %s176 = int_to_ptr.vmem [resolvable:$true] %s175
          %178 = dma.hbm_to_vmem [thread:$0]  %s174, 32, %s176, [#allocation6]
        $region20: #{tpu_custom_call.1} parent=11 // pred_fallthru
          _
      $region12: #{tpu_custom_call.1} parent=5 // pred_fallthru
        _
      %p179 = scmp.lt.s32.totalorder %s16, 2
      // Predicated region
      $region21: #{tpu_custom_call.1} parent=5 // pred_check
        %p180 = pneg %p179
      $region22: #{tpu_custom_call.1} parent=5 // pred_check_branch
        %182 = sbr.rel (%p180) target = $region24
      $region23: #{tpu_custom_call.1} parent=5 // pred_region
        // Predicated region
        $region25: #{tpu_custom_call.1} parent=23 // pred_check
          %p183 = pneg %p50
        $region26: #{tpu_custom_call.1} parent=23 // pred_check_branch
          %185 = sbr.rel (%p183) target = $region28
        $region27: #{tpu_custom_call.1} parent=23 // pred_region
          %s186 = sand.u32 %s40, 1
          %s187 = scalar_lea.sflag [#allocation3], %s186
          %s188 = sand.u32 %s40, 1
          %s189 = smul.addr %s188, 2
          %s190 = scalar_lea.vmem [#allocation2], %s189
          %192 = vsyncadd %s187, 0
          %s193 = sadd.s32 %s23, %s24
          %s194 = smul.addr %s193, 2
          %s195 = scalar_lea.hbm %s0, %s194
          %s197 = sshll.u32 %s195, 4
          %s198 = int_to_ptr.hbm [resolvable:$true] %s197
          %s199 = sshll.u32 %s190, 4
          %s200 = int_to_ptr.vmem [resolvable:$true] %s199
          %202 = dma.hbm_to_vmem [thread:$0]  %s198, 32, %s200, %s187
        $region28: #{tpu_custom_call.1} parent=23 // pred_fallthru
          _
      $region24: #{tpu_custom_call.1} parent=5 // pred_fallthru
        _
      %p203 = scmp.le.s32.totalorder 1, %s16
      %p204 = scmp.lt.s32.totalorder %s16, 3
      %p205 = pnand %p203, %p204
      %p206 = pneg %p205
      // Predicated region
      $region29: #{tpu_custom_call.1} parent=5 // pred_check
        _
      $region30: #{tpu_custom_call.1} parent=5 // pred_check_branch
        %208 = sbr.rel (%p205) target = $region32
      $region31: #{tpu_custom_call.1} parent=5 // pred_region
        %s209 = ssub.s32 %s16, 1
        %s210 = sand.u32 %s43, 1
        %s211 = scalar_lea.sflag [#allocation3], %s210
        %s212 = sand.u32 %s43, 1
        %s213 = smul.addr %s212, 2
        %s214 = scalar_lea.vmem [#allocation2], %s213
        // Predicated region
        $region33: #{tpu_custom_call.1} parent=31 // pred_check
          %p215 = pneg %p56
        $region34: #{tpu_custom_call.1} parent=31 // pred_check_branch
          %217 = sbr.rel (%p215) target = $region36
        $region35: #{tpu_custom_call.1} parent=31 // pred_region
          %219 = dma.done %s211, 32
        $region36: #{tpu_custom_call.1} parent=31 // pred_fallthru
          _
        // Predicated region
        $region37: #{tpu_custom_call.1} parent=31 // pred_check
          %p220 = pneg %p82
        $region38: #{tpu_custom_call.1} parent=31 // pred_check_branch
          %222 = sbr.rel (%p220) target = $region40
        $region39: #{tpu_custom_call.1} parent=31 // pred_region
          %224 = dma.done [#allocation6], 32
        $region40: #{tpu_custom_call.1} parent=31 // pred_fallthru
          _
        // Predicated region
        $region41: #{tpu_custom_call.1} parent=31 // pred_check
          %p225 = pneg %p108
        $region42: #{tpu_custom_call.1} parent=31 // pred_check_branch
          %227 = sbr.rel (%p225) target = $region44
        $region43: #{tpu_custom_call.1} parent=31 // pred_region
          %229 = dma.done [#allocation6], 32
        $region44: #{tpu_custom_call.1} parent=31 // pred_fallthru
          _
        %s230 = sand.u32 %s43, 1
        %s231 = scalar_lea.sflag [#allocation3], %s230
        %s232 = sand.u32 %s43, 1
        %s233 = smul.addr %s232, 2
        %s234 = scalar_lea.vmem [#allocation2], %s233
        %p235 = pneg %p56
        %p236 = pneg %p53
        %p237 = pneg %p82
        %p238 = pneg %p79
        %p239 = pneg %p108
        %p240 = pneg %p105
        %p241 = pneg %p136
        %p242 = pneg %p133
        %s243 = sand.u32 %s123, 1
        %s244 = scalar_lea.sflag [#allocation4], %s243
        %s245 = sand.u32 %s123, 1
        %s246 = smul.addr %s245, 2
        %s247 = scalar_lea.vmem [#allocation8], %s246
        %v248 = vld [vmem:[%s214] sm:$0x3]
        %v249 = vld [vmem:[#allocation5] sm:$0x3]
        %v250 = vld [vmem:[#allocation7] sm:$0x3]
        %251 = vrot.lane.b32.xlu0 %v248, 127
        %v252 = vpop.permute.xlu0 %251
        %253 = vrot.lane.b32.xlu0 %v248, 1
        %v254 = vpop.permute.xlu0 %253
        %v255 = vlaneseq
        %v256 = vand.u32 %v255, 127
        %v257 = vand.u32 %v256, 1
        %vm258 = vcmp.eq.s32.totalorder %v257, 0
        %v259 = vsel %vm258, %v252, %v254
        %v260 = vmul.f32 %v248, %v249
        %v261 = vmul.f32 %v259, %v250
        %v262 = vadd.f32 %v260, %v261
        %263 = vst [vmem:[%s247] sm:$0x3] %v262
        %s264 = sand.u32 %s123, 1
        %s265 = scalar_lea.sflag [#allocation4], %s264
        %s266 = sand.u32 %s123, 1
        %s267 = smul.addr %s266, 2
        %s268 = scalar_lea.vmem [#allocation8], %s267
        // Predicated region
        $region45: #{tpu_custom_call.1} parent=31 // pred_check
          %p269 = pneg %p133
        $region46: #{tpu_custom_call.1} parent=31 // pred_check_branch
          %271 = sbr.rel (%p269) target = $region48
        $region47: #{tpu_custom_call.1} parent=31 // pred_region
          %273 = vsyncadd %s265, 0
          %s274 = sadd.s32 %s25, %s26
          %s275 = smul.addr %s274, 2
          %s276 = scalar_lea.hbm %s3, %s275
          %s278 = sshll.u32 %s268, 4
          %s279 = int_to_ptr.vmem [resolvable:$true] %s278
          %s280 = sshll.u32 %s276, 4
          %s281 = int_to_ptr.hbm [resolvable:$true] %s280
          %283 = dma.vmem_to_hbm [thread:$0]  %s279, 32, %s281, %s265
        $region48: #{tpu_custom_call.1} parent=31 // pred_fallthru
          _
      $region32: #{tpu_custom_call.1} parent=5 // pred_fallthru
        _
      %p284 = scmp.le.s32.totalorder 2, %s16
      // Predicated region
      $region49: #{tpu_custom_call.1} parent=5 // pred_check
        %p285 = pneg %p284
      $region50: #{tpu_custom_call.1} parent=5 // pred_check_branch
        %287 = sbr.rel (%p285) target = $region52
      $region51: #{tpu_custom_call.1} parent=5 // pred_region
        %s288 = ssub.s32 %s16, 2
        // Predicated region
        $region53: #{tpu_custom_call.1} parent=51 // pred_check
          %p289 = pneg %p139
        $region54: #{tpu_custom_call.1} parent=51 // pred_check_branch
          %291 = sbr.rel (%p289) target = $region56
        $region55: #{tpu_custom_call.1} parent=51 // pred_region
          %s292 = sand.u32 %s124, 1
          %s293 = scalar_lea.sflag [#allocation4], %s292
          %s294 = sand.u32 %s124, 1
          %s295 = smul.addr %s294, 2
          %s296 = scalar_lea.vmem [#allocation8], %s295
          %298 = dma.done %s293, 32
        $region56: #{tpu_custom_call.1} parent=51 // pred_fallthru
          _
      $region52: #{tpu_custom_call.1} parent=5 // pred_fallthru
        _
    $region6: #{tpu_custom_call.1} parent=1 // loop_footer
      %s20 = sadd.s32 1, %s16
    $region7: #{tpu_custom_call.1} parent=1 // loop_footer_branch
      %15 = sbr.rel target = $region3
    $region8: #{tpu_custom_call.1} parent=1 // loop_exit
      _
    %299 = vsyncpa [#allocation3], 1
    %s300 = scalar_lea.sflag [#allocation3], 1
    %301 = vsyncpa %s300, 1
    %302 = vsyncpa [#allocation6], 1
    %303 = vsyncpa [#allocation4], 1
    %s304 = scalar_lea.sflag [#allocation4], 1
    %305 = vsyncpa %s304, 1

</llo_original>
